<compile_context>
chip_gen: v5e
topology: v5e:2x2
jax: 0.10.0
libtpu: 0.0.40
codegen_flags: <defaults>
</compile_context>

<pallas_src>
import functools

import jax
import jax.numpy as jnp
from jax import lax
from jax.experimental import pallas as pl
from jax.experimental.pallas import tpu as pltpu


def _policy_kernel(x_ref, w_ref, b_ref, o_ref, acc_ref):
    k = pl.program_id(1)

    @pl.when(k == 0)
    def _():
        acc_ref[...] = jnp.zeros_like(acc_ref)

    # Partial matmul on the MXU.
    #   x tile: (tm, tk)  f32 -> bf16 (tiny VPU cast on the tile)
    #   W tile: (V_out, tk) bf16, PyTorch layout -- contract dim 1 with dim 1
    #   so no transpose is ever materialized.
    x = x_ref[...].astype(jnp.bfloat16)
    acc_ref[...] += lax.dot_general(
        x, w_ref[...],
        dimension_numbers=(((1,), (1,)), ((), ())),
        preferred_element_type=jnp.float32)

    @pl.when(k == pl.num_programs(1) - 1)
    def _():
        logits = acc_ref[...] + b_ref[...]                  # (tm, V_out) f32
        m = jnp.max(logits, axis=-1, keepdims=True)
        e = jnp.exp(logits - m)
        denom = jnp.sum(e, axis=-1, keepdims=True)
        # EUP approximate reciprocal + one Newton refinement (full f32 accuracy,
        # avoids the VPU divide sequence).
        inv = pl.reciprocal(denom, approx=True)
        inv = inv * (2.0 - denom * inv)
        o_ref[...] = (e * inv).astype(o_ref.dtype)


@functools.partial(jax.jit, static_argnames=("tm", "tk"))
def high_level_policy_forward(x, weight_bf16, bias_2d, *, tm=None, tk=None):
    """softmax(x @ W.T + b), matching PyTorch nn.Linear + softmax(dim=-1).

    x:           (B, V_in)      float32
    weight_bf16: (V_out, V_in)  bfloat16  (PyTorch layout; cast once at init)
    bias_2d:     (1, V_out)     float32
    """
    B, V_in = x.shape
    V_out = weight_bf16.shape[0]

    # Tile sizes: full batch up to one MXU height; K tiled at 512 when divisible.
    if tm is None:
        tm = B if B <= 256 else 256
    if tk is None:
        tk = 512 if (V_in % 512 == 0) else V_in

    grid = (pl.cdiv(B, tm), pl.cdiv(V_in, tk))

    # VMEM budget: double-buffered inputs/outputs + accumulator; sized with
    # headroom and capped below v7x's 64 MiB physical VMEM.
    vmem_needed = (2 * tm * tk * 4            # x tiles (f32)
                   + 2 * V_out * tk * 2       # weight tiles (bf16)
                   + 2 * V_out * 4            # bias
                   + 2 * tm * V_out * 4       # output tiles
                   + tm * V_out * 4)          # f32 accumulator scratch
    vmem_limit = min(max(2 * vmem_needed, 4 * 1024 * 1024), 48 * 1024 * 1024)

    return pl.pallas_call(
        _policy_kernel,
        out_shape=jax.ShapeDtypeStruct((B, V_out), jnp.float32),
        grid_spec=pltpu.PrefetchScalarGridSpec(
            num_scalar_prefetch=0,
            grid=grid,
            in_specs=[
                pl.BlockSpec((tm, tk), lambda i, k: (i, k)),      # x
                pl.BlockSpec((V_out, tk), lambda i, k: (0, k)),   # W (untransposed)
                pl.BlockSpec((1, V_out), lambda i, k: (0, 0)),    # bias
            ],
            out_specs=pl.BlockSpec((tm, V_out), lambda i, k: (i, 0)),
            scratch_shapes=[pltpu.VMEM((tm, V_out), jnp.float32)],
        ),
        compiler_params=pltpu.CompilerParams(
            dimension_semantics=("parallel", "arbitrary"),
            vmem_limit_bytes=vmem_limit,
        ),
    )(x, weight_bf16, bias_2d)


if __name__ == "__main__":
    vocab_size = 128
    batch = 8

    key = jax.random.PRNGKey(0)
    kx, kw, kb = jax.random.split(key, 3)

    # Deterministic parameter init (mimics nn.Linear's uniform(-1/sqrt(in), 1/sqrt(in))).
    bound = 1.0 / jnp.sqrt(jnp.float32(vocab_size))
    weight = jax.random.uniform(kw, (vocab_size, vocab_size),
                                minval=-bound, maxval=bound, dtype=jnp.float32)
    bias = jax.random.uniform(kb, (vocab_size,),
                              minval=-bound, maxval=bound, dtype=jnp.float32)
    x = jax.random.normal(kx, (batch, vocab_size), dtype=jnp.float32)

    # One-time parameter prep (outside the per-step hot path): bf16 weight in the
    # original PyTorch layout (no transpose), f32 bias as a (1, V) row.
    weight_bf16 = weight.astype(jnp.bfloat16)
    bias_2d = bias.reshape(1, vocab_size)

    out = high_level_policy_forward(x, weight_bf16, bias_2d)
    out = jax.block_until_ready(out)

    # Reference with the same precision path (bf16 inputs to the matmul, f32 accumulate).
    xb = x.astype(jnp.bfloat16).astype(jnp.float32)
    wb = weight_bf16.astype(jnp.float32)
    ref = jax.nn.softmax(xb @ wb.T + bias, axis=-1)

    assert out.shape == (batch, vocab_size)
    assert jnp.allclose(jnp.sum(out, axis=-1), 1.0, atol=1e-5)
    assert jnp.allclose(out, ref, atol=1e-5, rtol=1e-4)

    print("KERNEL_OK")
</pallas_src>

<mosaic_0001>
module attributes {stable_mosaic.version = 11 : i64} {
  func.func @_policy_kernel(%arg0: i32, %arg1: i32, %arg2: memref<8x128xf32, #tpu.memory_space<vmem>>, %arg3: memref<128x128xbf16, #tpu.memory_space<vmem>>, %arg4: memref<1x128xf32, #tpu.memory_space<vmem>>, %arg5: memref<8x128xf32, #tpu.memory_space<vmem>>, %arg6: memref<8x128xf32, #tpu.memory_space<vmem>>) attributes {dimension_semantics = [#tpu.dimension_semantics<parallel>, #tpu.dimension_semantics<arbitrary>], iteration_bounds = array<i64: 1, 1>, scalar_prefetch = 0 : i64, scratch_operands = 1 : i64, tpu.core_type = #tpu.core_type<tc>, window_params = [{transform_indices = @transform_0, window_bounds = array<i64: 8, 128>}, {transform_indices = @transform_1, window_bounds = array<i64: 128, 128>}, {pipeline_mode = #tpu.pipeline_mode<synchronous>, transform_indices = @transform_2, window_bounds = array<i64: 1, 128>}, {transform_indices = @transform_3, window_bounds = array<i64: 8, 128>}]} {
    %c0_i32 = arith.constant 0 : i32
    %0 = arith.cmpi eq, %arg1, %c0_i32 : i32
    %1 = arith.extui %0 : i1 to i32
    %c0_i32_0 = arith.constant 0 : i32
    %2 = arith.cmpi ne, %1, %c0_i32_0 : i32
    scf.if %2 {
      %cst_10 = arith.constant 0.000000e+00 : f32
      %13 = vector.broadcast %cst_10 : f32 to vector<8x128xf32>
      %c0_11 = arith.constant 0 : index
      %c0_12 = arith.constant 0 : index
      %14 = vector.load %arg6[%c0_11, %c0_12] : memref<8x128xf32, #tpu.memory_space<vmem>>, vector<8x128xf32>
      tpu.vector_store %arg6[%c0_11, %c0_12], %13 {strides = array<i32>} : memref<8x128xf32, #tpu.memory_space<vmem>>, vector<8x128xf32>,
    } else {
    }
    %c0 = arith.constant 0 : index
    %c0_1 = arith.constant 0 : index
    %3 = vector.load %arg2[%c0, %c0_1] : memref<8x128xf32, #tpu.memory_space<vmem>>, vector<8x128xf32>
    %4 = arith.truncf %3 : vector<8x128xf32> to vector<8x128xbf16>
    %c0_2 = arith.constant 0 : index
    %c0_3 = arith.constant 0 : index
    %5 = vector.load %arg6[%c0_2, %c0_3] : memref<8x128xf32, #tpu.memory_space<vmem>>, vector<8x128xf32>
    %c0_4 = arith.constant 0 : index
    %c0_5 = arith.constant 0 : index
    %6 = vector.load %arg3[%c0_4, %c0_5] : memref<128x128xbf16, #tpu.memory_space<vmem>>, vector<128x128xbf16>
    %cst = arith.constant dense<0.000000e+00> : vector<8x128xf32>
    %7 = tpu.matmul %4, %6, %cst {dimension_numbers = #tpu.dot_dimension_numbers<[1], [1], [0], [0], [0, 0, 1, 0], [], []>} : vector<8x128xbf16>, vector<128x128xbf16>, vector<8x128xf32> -> vector<8x128xf32>
    %8 = arith.addf %5, %7 : vector<8x128xf32>
    %c0_6 = arith.constant 0 : index
    %c0_7 = arith.constant 0 : index
    %9 = vector.load %arg6[%c0_6, %c0_7] : memref<8x128xf32, #tpu.memory_space<vmem>>, vector<8x128xf32>
    tpu.vector_store %arg6[%c0_6, %c0_7], %8 {strides = array<i32>} : memref<8x128xf32, #tpu.memory_space<vmem>>, vector<8x128xf32>,
    %c0_i32_8 = arith.constant 0 : i32
    %10 = arith.cmpi eq, %arg1, %c0_i32_8 : i32
    %11 = arith.extui %10 : i1 to i32
    %c0_i32_9 = arith.constant 0 : i32
    %12 = arith.cmpi ne, %11, %c0_i32_9 : i32
    scf.if %12 {
      %c0_10 = arith.constant 0 : index
      %c0_11 = arith.constant 0 : index
      %13 = vector.load %arg6[%c0_10, %c0_11] : memref<8x128xf32, #tpu.memory_space<vmem>>, vector<8x128xf32>
      %c0_12 = arith.constant 0 : index
      %c0_13 = arith.constant 0 : index
      %14 = vector.load %arg4[%c0_12, %c0_13] : memref<1x128xf32, #tpu.memory_space<vmem>>, vector<1x128xf32>
      %15 = vector.broadcast %14 : vector<1x128xf32> to vector<8x128xf32>
      %16 = arith.addf %13, %15 : vector<8x128xf32>
      %cst_14 = arith.constant dense<0xFF800000> : vector<8xf32>
      %17 = vector.multi_reduction <maximumf>, %16, %cst_14 [1] : vector<8x128xf32> to vector<8xf32>
      %18 = vector.shape_cast %17 : vector<8xf32> to vector<8x1xf32>
      %19 = vector.broadcast %18 : vector<8x1xf32> to vector<8x128xf32>
      %20 = arith.subf %16, %19 : vector<8x128xf32>
      %21 = math.exp %20 : vector<8x128xf32>
      %cst_15 = arith.constant dense<0.000000e+00> : vector<8xf32>
      %22 = vector.multi_reduction <add>, %21, %cst_15 [1] : vector<8x128xf32> to vector<8xf32>
      %23 = vector.shape_cast %22 : vector<8xf32> to vector<8x1xf32>
      %24 = tpu.reciprocal %23 {approx = true} : vector<8x1xf32> -> vector<8x1xf32>
      %25 = arith.mulf %23, %24 : vector<8x1xf32>
      %cst_16 = arith.constant 2.000000e+00 : f32
      %26 = vector.broadcast %cst_16 : f32 to vector<8x1xf32>
      %27 = arith.subf %26, %25 : vector<8x1xf32>
      %28 = arith.mulf %24, %27 : vector<8x1xf32>
      %29 = vector.broadcast %28 : vector<8x1xf32> to vector<8x128xf32>
      %30 = arith.mulf %21, %29 : vector<8x128xf32>
      %c0_17 = arith.constant 0 : index
      %c0_18 = arith.constant 0 : index
      %31 = vector.load %arg5[%c0_17, %c0_18] : memref<8x128xf32, #tpu.memory_space<vmem>>, vector<8x128xf32>
      tpu.vector_store %arg5[%c0_17, %c0_18], %30 {strides = array<i32>} : memref<8x128xf32, #tpu.memory_space<vmem>>, vector<8x128xf32>,
    } else {
    }
    return
  }
  func.func @transform_0(%arg0: i32, %arg1: i32) -> (i32, i32) {
    %c0_i32 = arith.constant 0 : i32
    return %arg0, %arg1 : i32, i32
  }
  func.func @transform_1(%arg0: i32, %arg1: i32) -> (i32, i32) {
    %c0_i32 = arith.constant 0 : i32
    %c0_i32_0 = arith.constant 0 : i32
    return %c0_i32, %arg1 : i32, i32
  }
  func.func @transform_2(%arg0: i32, %arg1: i32) -> (i32, i32) {
    %c0_i32 = arith.constant 0 : i32
    %c0_i32_0 = arith.constant 0 : i32
    %c0_i32_1 = arith.constant 0 : i32
    return %c0_i32, %c0_i32_0 : i32, i32
  }
  func.func @transform_3(%arg0: i32, %arg1: i32) -> (i32, i32) {
    %c0_i32 = arith.constant 0 : i32
    %c0_i32_0 = arith.constant 0 : i32
    return %arg0, %c0_i32 : i32, i32
  }
}

</mosaic_0001>

<llo_original>
// kernel: high_level_policy_forward.1
$region0: #{high_level_policy_forward.1}
  #allocation0 [shape = 'u32[]', space=smem, size = 0x4, offset = 0x4, fixed_abs, tag = 'smem constant byte address 0x4 - core index']
  #allocation1 [shape = 'u32[72,128]{1,0:T(1,128)}', space=vmem, size = 0x9000, scoped, tag = 'internal scratch']
  #allocation2 [shape = 'f32[8,128]{1,0:T(8,128)}', space=vmem, size = 0x1000, scoped, tag = 'scratch operand']
  %s0 = inlined_call_operand.hbm [shape: f32[8,128], index: 0, kind: input, shape index: {}]
  %s1 = inlined_call_operand.hbm [shape: bf16[128,128], index: 1, kind: input, shape index: {}]
  %s2 = inlined_call_operand.vmem [shape: f32[1,128], index: 2, kind: input, shape index: {}]
  %s3 = inlined_call_operand.hbm [shape: f32[8,128], index: 3, kind: output, shape index: {}]
  %s4 = sld [smem:[#allocation0]]
  $region38: #{high_level_policy_forward.1} parent=0
    _
  %s6 = ssub.s32 1, %s4
  %s7 = scalar_select 0, %s6, %s4
  $region1: #{high_level_policy_forward.1} parent=0
    #allocation3 [shape = 'u8[4096]{0}', space=vmem, size = 0x1000, scoped, tag = 'input window, operand 0, single buffered']
    #allocation4 [shape = 's32[1]{0}', space=sflag, size = 0x4, scoped, tag = 'scoped memory for high_level_policy_forward.1']
    #allocation5 [shape = 's32[1]{0}', space=sflag, size = 0x4, scoped, tag = 'scoped memory for high_level_policy_forward.1']
    #allocation6 [shape = 'u8[32768]{0}', space=vmem, size = 0x8000, scoped, tag = 'input window, operand 1, single buffered']
    #allocation7 [shape = 's32[1]{0}', space=sflag, size = 0x4, scoped, tag = 'scoped memory for high_level_policy_forward.1']
    #allocation8 [shape = 'u8[4096]{0}', space=vmem, size = 0x1000, scoped, tag = 'output window, operand 0, single buffered']
    %8 = vsyncpa [#allocation4], 0
    %9 = vsyncpa [#allocation7], 0
    %10 = vsyncpa [#allocation5], 0
    // Predicated region
    $region2: #{high_level_policy_forward.1} parent=1 // pred_check
      _
    $region3: #{high_level_policy_forward.1} parent=1 // pred_check_branch
      %12 = sbr.rel (0) target = $region5
    $region4: #{high_level_policy_forward.1} parent=1 // pred_region
      %14 = vsyncadd [#allocation4], 0
      %s16 = sshll.u32 %s0, 4
      %s17 = int_to_ptr.hbm [resolvable:$true] %s16
      %s18 = sshll.u32 [#allocation3], 4
      %s19 = int_to_ptr.vmem [resolvable:$true] %s18
      %21 = dma.hbm_to_vmem [thread:$0]  %s17, 128, %s19, [#allocation4]
    $region5: #{high_level_policy_forward.1} parent=1 // pred_fallthru
      _
    // Predicated region
    $region6: #{high_level_policy_forward.1} parent=1 // pred_check
      _
    $region7: #{high_level_policy_forward.1} parent=1 // pred_check_branch
      %23 = sbr.rel (0) target = $region9
    $region8: #{high_level_policy_forward.1} parent=1 // pred_region
      %25 = vsyncadd [#allocation7], 0
      %s26 = sshll.u32 %s1, 4
      %s27 = int_to_ptr.hbm [resolvable:$true] %s26
      %s28 = sshll.u32 [#allocation6], 4
      %s29 = int_to_ptr.vmem [resolvable:$true] %s28
      %34 = dma.hbm_to_vmem [thread:$0]  %s27, 1024, %s29, [#allocation7], 64, 64, 4
    $region9: #{high_level_policy_forward.1} parent=1 // pred_fallthru
      _
    // Predicated region
    $region10: #{high_level_policy_forward.1} parent=1 // pred_check
      _
    $region11: #{high_level_policy_forward.1} parent=1 // pred_check_branch
      %36 = sbr.rel (0) target = $region13
    $region12: #{high_level_policy_forward.1} parent=1 // pred_region
      _
    $region13: #{high_level_policy_forward.1} parent=1 // pred_fallthru
      _
    // Predicated region
    $region14: #{high_level_policy_forward.1} parent=1 // pred_check
      _
    $region15: #{high_level_policy_forward.1} parent=1 // pred_check_branch
      %38 = sbr.rel (0) target = $region17
    $region16: #{high_level_policy_forward.1} parent=1 // pred_region
      %40 = dma.done [#allocation4], 128
    $region17: #{high_level_policy_forward.1} parent=1 // pred_fallthru
      _
    // Predicated region
    $region18: #{high_level_policy_forward.1} parent=1 // pred_check
      _
    $region19: #{high_level_policy_forward.1} parent=1 // pred_check_branch
      %42 = sbr.rel (0) target = $region21
    $region20: #{high_level_policy_forward.1} parent=1 // pred_region
      %44 = dma.done [#allocation7], 1024
    $region21: #{high_level_policy_forward.1} parent=1 // pred_fallthru
      _
    %p45 = scmp.eq.s32.totalorder 0, 0
    // Predicated region
    $region22: #{high_level_policy_forward.1} parent=1 // pred_check
      %p46 = pneg %p45
    $region23: #{high_level_policy_forward.1} parent=1 // pred_check_branch
      %48 = sbr.rel (%p46) target = $region25
    $region24: #{high_level_policy_forward.1} parent=1 // pred_region
      %49 = vst [vmem:[#allocation2] sm:$0xff] 0.0
    $region25: #{high_level_policy_forward.1} parent=1 // pred_fallthru
      _
    %v50 = vld [vmem:[#allocation3] sm:$0xff]
    %v51 = vpack.c.bf16 %v50, %v50
    %v52 = vld [vmem:[#allocation2] sm:$0xff]
    %v53 = vld [vmem:[#allocation6] sm:$0xf]
    %v54 = vld [vmem:[#allocation6 + $0x4] sm:$0xf]
    %v55 = vld [vmem:[#allocation6 + $0x8] sm:$0xf]
    %v56 = vld [vmem:[#allocation6 + $0xc] sm:$0xf]
    %v57 = vld [vmem:[#allocation6 + $0x10] sm:$0xf]
    %v58 = vld [vmem:[#allocation6 + $0x14] sm:$0xf]
    %v59 = vld [vmem:[#allocation6 + $0x18] sm:$0xf]
    %v60 = vld [vmem:[#allocation6 + $0x1c] sm:$0xf]
    %v61 = vld [vmem:[#allocation6 + $0x20] sm:$0xf]
    %v62 = vld [vmem:[#allocation6 + $0x24] sm:$0xf]
    %v63 = vld [vmem:[#allocation6 + $0x28] sm:$0xf]
    %v64 = vld [vmem:[#allocation6 + $0x2c] sm:$0xf]
    %v65 = vld [vmem:[#allocation6 + $0x30] sm:$0xf]
    %v66 = vld [vmem:[#allocation6 + $0x34] sm:$0xf]
    %v67 = vld [vmem:[#allocation6 + $0x38] sm:$0xf]
    %v68 = vld [vmem:[#allocation6 + $0x3c] sm:$0xf]
    %v85 = vunpack.c.l.b16 %v53
    %v86 = vunpack.c.l.b16 %v54
    %v87 = vunpack.c.l.b16 %v55
    %v88 = vunpack.c.l.b16 %v56
    %v89 = vunpack.c.l.b16 %v57
    %v90 = vunpack.c.l.b16 %v58
    %v91 = vunpack.c.l.b16 %v59
    %v92 = vunpack.c.l.b16 %v60
    %v93 = vunpack.c.l.b16 %v61
    %v94 = vunpack.c.l.b16 %v62
    %v95 = vunpack.c.l.b16 %v63
    %v96 = vunpack.c.l.b16 %v64
    %v97 = vunpack.c.l.b16 %v65
    %v98 = vunpack.c.l.b16 %v66
    %v99 = vunpack.c.l.b16 %v67
    %v100 = vunpack.c.l.b16 %v68
    %v101 = vpack.c.b16 %v86, %v85
    %v102 = vpack.c.b16 %v88, %v87
    %v103 = vpack.c.b16 %v90, %v89
    %v104 = vpack.c.b16 %v92, %v91
    %v105 = vpack.c.b16 %v94, %v93
    %v106 = vpack.c.b16 %v96, %v95
    %v107 = vpack.c.b16 %v98, %v97
    %v108 = vpack.c.b16 %v100, %v99
    %117 = vmatpush.bf16.xpose.msra.mxu0 %v108
    %118 = vmatpush.bf16.xpose.msra.mxu0 %v107
    %119 = vmatpush.bf16.xpose.msra.mxu0 %v106
    %120 = vmatpush.bf16.xpose.msra.mxu0 %v105
    %121 = vmatpush.bf16.xpose.msra.mxu0 %v104
    %122 = vmatpush.bf16.xpose.msra.mxu0 %v103
    %123 = vmatpush.bf16.xpose.msra.mxu0 %v102
    %124 = vmatpush.bf16.xpose.msra.mxu0 %v101
    %125 = vmatmul.bf16.gmra.mxu0 %v51
    %v126 = vpop.f32.mrf.mxu0
    %v127 = vadd.f32 0.0, %v126
    %v128 = vpop.f32.mrf.mxu0
    %129 = vdwg.mxu0
    %v130 = vadd.f32 %v52, %v127
    %131 = vst [vmem:[#allocation2] sm:$0xff] %v130
    // Predicated region
    $region26: #{high_level_policy_forward.1} parent=1 // pred_check
      %p132 = pneg %p45
    $region27: #{high_level_policy_forward.1} parent=1 // pred_check_branch
      %134 = sbr.rel (%p132) target = $region29
    $region28: #{high_level_policy_forward.1} parent=1 // pred_region
      %v135 = vld [vmem:[#allocation2] sm:$0xff]
      %v136 = vld [vmem:[%s2] sm:$0x1]
      %v138 = vperm.slane %v136, 0
      %v140 = vadd.f32 %v135, %v138
      %141 = vmax.xlane.f32.xlu0 %v140
      %v142 = vpop.xlane.xlu0 %141
      %v143 = vsub.f32 %v140, %v142
      %v144 = vmul.f32 %v143, 1.442695
      %v145 = vpow.pop %v144
      %146 = vadd.xlane.f32.xlu0 %v145
      %v147 = vpop.xlane.xlu0 %146
      %v148 = vrcp.pop %v147
      %v149 = vmul.f32 %v147, %v148
      %v150 = vsub.f32 2.0, %v149
      %v151 = vmul.f32 %v148, %v150
      %v152 = vmul.f32 %v145, %v151
      %153 = vst [vmem:[#allocation8] sm:$0xff] %v152
    $region29: #{high_level_policy_forward.1} parent=1 // pred_fallthru
      _
    // Predicated region
    $region30: #{high_level_policy_forward.1} parent=1 // pred_check
      _
    $region31: #{high_level_policy_forward.1} parent=1 // pred_check_branch
      %155 = sbr.rel (0) target = $region33
    $region32: #{high_level_policy_forward.1} parent=1 // pred_region
      %157 = vsyncadd [#allocation5], 0
      %s159 = sshll.u32 [#allocation8], 4
      %s160 = int_to_ptr.vmem [resolvable:$true] %s159
      %s161 = sshll.u32 %s3, 4
      %s162 = int_to_ptr.hbm [resolvable:$true] %s161
      %164 = dma.vmem_to_hbm [thread:$0]  %s160, 128, %s162, [#allocation5]
    $region33: #{high_level_policy_forward.1} parent=1 // pred_fallthru
      _
    // Predicated region
    $region34: #{high_level_policy_forward.1} parent=1 // pred_check
      _
    $region35: #{high_level_policy_forward.1} parent=1 // pred_check_branch
      %166 = sbr.rel (0) target = $region37
    $region36: #{high_level_policy_forward.1} parent=1 // pred_region
      %168 = dma.done [#allocation5], 128
    $region37: #{high_level_policy_forward.1} parent=1 // pred_fallthru
      _
    %169 = vsyncpa [#allocation4], 1
    %170 = vsyncpa [#allocation7], 1
    %171 = vsyncpa [#allocation5], 1

</llo_original>
